<compile_context>
chip_gen: v6e
topology: v6e:2x2x1
jax: 0.10.0
libtpu: 0.0.40
codegen_flags: <defaults>
</compile_context>

<pallas_src>
import numpy as np
import jax
import jax.numpy as jnp
from jax.experimental import pallas as pl
from jax.experimental.pallas import tpu as pltpu

BN_EPS = 1e-5
LANE = 128
SUBLANE = 8


def _round_up(n, m):
    return (n + m - 1) // m * m


# ---------------------------------------------------------------------------
# Graph construction (mirrors cal_term_dim / construct_MIE_layer /
# construct_NN_graph of the torch module, without networkx).
# Edges point child -> parent, so "predecessors(term)" == children(term).
# ---------------------------------------------------------------------------
def build_model_structure(nodes, edges, input_dim, num_hiddens_ratio):
    preds = {n: [] for n in nodes}
    succs = {n: [] for n in nodes}
    for c, p in edges:
        preds[p].append(c)
        succs[c].append(p)

    # term_dim_map[term] = dG.degree(term) * num_hiddens_ratio
    term_dim = {n: int((len(preds[n]) + len(succs[n])) * num_hiddens_ratio)
                for n in nodes}

    # MIE layer: nodes with in_degree == 0
    mie = [n for n in nodes if len(preds[n]) == 0]

    # topological layering by iterative leaf peeling (layer 0 == MIE terms)
    remaining = set(nodes)
    rem_preds = {n: set(preds[n]) for n in nodes}
    layers = []
    while remaining:
        leaves = [n for n in nodes if n in remaining and len(rem_preds[n]) == 0]
        layers.append(leaves)
        for leaf in leaves:
            remaining.discard(leaf)
        for n in remaining:
            rem_preds[n] -= set(leaves)

    in_size = {}
    for n in nodes:
        s = sum(term_dim[c] for c in preds[n])
        in_size[n] = s if s != 0 else input_dim
    return preds, term_dim, mie, layers, in_size


def init_linear(key, fan_in, fan_out):
    k1, k2 = jax.random.split(key)
    bound = 1.0 / float(fan_in) ** 0.5
    w = jax.random.uniform(k1, (fan_in, fan_out), jnp.float32, -bound, bound)
    b = jax.random.uniform(k2, (fan_out,), jnp.float32, -bound, bound)
    return w, b


def init_params(key, nodes, term_dim, in_size):
    params = {}
    for n in nodes:
        key, k1, k2 = jax.random.split(key, 3)
        h = term_dim[n]
        w1, b1 = init_linear(k1, in_size[n], h)
        w2, b2 = init_linear(k2, h, 2)
        params[n] = dict(
            w1=w1, b1=b1,
            g1=jnp.ones((h,), jnp.float32), be1=jnp.zeros((h,), jnp.float32),
            w2=w2, b2=b2,
            g2=jnp.ones((2,), jnp.float32), be2=jnp.zeros((2,), jnp.float32),
        )
    return params


# ---------------------------------------------------------------------------
# Host-side packing: per-layer block-structured bf16 W1 over the activation
# slab (x block EXCLUDED), per-layer f32 (bias, gamma, beta) rows, and the
# 128-lane/128-row padded 'final' aux head.
# ---------------------------------------------------------------------------
def pack_dag(preds, term_dim, mie, layers, params, input_dim):
    assert "final" in term_dim
    mie_set = set(mie)
    xpad = _round_up(input_dim, LANE)

    # Place 'final' first within its layer so its slab block starts on a
    # 128-lane boundary (aligned K slice for the aux-head matmul).
    layers = [(["final"] + [t for t in layer if t != "final"])
              if "final" in layer else list(layer) for layer in layers]

    # The slab holds ONLY layer outputs (x is never copied into it).
    slab_off = {}
    layer_meta = []                          # (base, lpad, rows) per layer
    base = 0
    for li, layer in enumerate(layers):
        hl = sum(term_dim[t] for t in layer)
        lpad = _round_up(max(hl, 1), LANE)
        c = 0
        for t in layer:
            slab_off[t] = base + c
            c += term_dim[t]
        rows = xpad if li == 0 else base     # layer 0 reads x; later layers never see x rows
        layer_meta.append((base, lpad, rows))
        base += lpad
    slab_w = base

    packed = []
    for li, layer in enumerate(layers):
        _lbase, lpad, rows = layer_meta[li]
        w1 = np.zeros((rows, lpad), np.float32)      # rows = x block (li==0) or slab prefix
        p1 = np.zeros((3, lpad), np.float32)         # [bias; gamma; beta]
        p1[1, :] = 1.0                               # gamma pad (pad cols stay exactly 0)
        c = 0
        for t in layer:
            h = term_dim[t]
            wt = np.asarray(params[t]["w1"], np.float32)     # (in_size[t], h)
            if t in mie_set:                                  # layer 0 only: consumes x
                w1[0:input_dim, c:c + h] = wt
            else:
                r = 0
                for ch in preds[t]:                           # == torch.cat order
                    hc = term_dim[ch]
                    o = slab_off[ch]
                    w1[o:o + hc, c:c + h] = wt[r:r + hc, :]
                    r += hc
            p1[0, c:c + h] = np.asarray(params[t]["b1"], np.float32)
            p1[1, c:c + h] = np.asarray(params[t]["g1"], np.float32)
            p1[2, c:c + h] = np.asarray(params[t]["be1"], np.float32)
            c += h
        packed += [jnp.asarray(w1, dtype=jnp.bfloat16), jnp.asarray(p1)]

    # 'final' aux head: K padded to a whole 128-aligned slab block (zero rows
    # beyond h_final), output padded to 128 lanes -> unmasked HBM store.
    f_h = term_dim["final"]
    f_base = slab_off["final"]
    k2 = _round_up(max(f_h, 1), LANE)
    w2 = np.zeros((k2, LANE), np.float32)
    w2[0:f_h, 0:2] = np.asarray(params["final"]["w2"], np.float32)
    p2 = np.zeros((3, LANE), np.float32)
    p2[1, :] = 1.0
    p2[0, 0:2] = np.asarray(params["final"]["b2"], np.float32)
    p2[1, 0:2] = np.asarray(params["final"]["g2"], np.float32)
    p2[2, 0:2] = np.asarray(params["final"]["be2"], np.float32)
    packed += [jnp.asarray(w2, dtype=jnp.bfloat16), jnp.asarray(p2)]

    meta = dict(xpad=xpad, slab_w=slab_w, layer_meta=layer_meta,
                f_base=f_base, k2=k2)
    return packed, meta


# ---------------------------------------------------------------------------
# The fused whole-DAG kernel.
# ---------------------------------------------------------------------------
def _make_dag_kernel(meta, num_layers, batch_pad, batch_real):
    layer_meta = meta["layer_meta"]
    f_base, k2 = meta["f_base"], meta["k2"]
    inv_b = float(1.0 / batch_real)
    bf16 = jnp.bfloat16

    def kernel(*refs):
        x_ref = refs[0]                               # (Bpad, xpad) f32, lane-dense padded
        lrefs = refs[1:1 + 2 * num_layers]
        w2_ref = refs[1 + 2 * num_layers]
        p2_ref = refs[2 + 2 * num_layers]
        out_ref = refs[3 + 2 * num_layers]
        slab = refs[4 + 2 * num_layers]               # VMEM scratch (Bpad, slab_w) f32

        # Row mask: BN statistics use only the real batch rows, so padding the
        # batch for sublane/MXU alignment never changes the torch semantics.
        rows = jax.lax.broadcasted_iota(jnp.int32, (batch_pad, 1), 0)
        mvec = (rows < batch_real).astype(jnp.float32)

        def bn_stats(h):
            # One-pass, biased (matches training-mode BatchNorm1d), masked rows.
            # TODO(synk): at large Bpad compute these column sums as a
            # (1, Bpad) @ h matmul on the otherwise-idle MXU slot.
            hm = h * mvec
            s1 = jnp.sum(hm, axis=0, keepdims=True)
            s2 = jnp.sum(hm * h, axis=0, keepdims=True)
            mu = s1 * inv_b
            var = jnp.maximum(s2 * inv_b - mu * mu, 0.0)
            return mu, var

        # One packed bf16 matmul + tanh + per-column BatchNorm per topo layer.
        for li in range(num_layers):
            base, lpad, _rows = layer_meta[li]
            w1 = lrefs[2 * li][...]                   # (rows_li, lpad) bf16
            p1 = lrefs[2 * li + 1][...]               # (3, lpad) f32 [bias; gamma; beta]
            if li == 0:
                acts = x_ref[...].astype(bf16)        # layer 0 == MIE terms: reads x only
            else:
                acts = slab[:, 0:base].astype(bf16)   # earlier layer outputs only (no x rows)
            z = jnp.dot(acts, w1, preferred_element_type=jnp.float32) + p1[0:1, :]
            h = jnp.tanh(z)
            mu, var = bn_stats(h)
            scale = p1[1:2, :] * jax.lax.rsqrt(var + BN_EPS)   # fold gamma on the (1,H) row
            slab[:, base:base + lpad] = (h - mu) * scale + p1[2:3, :]

        # Aux head of 'final' only (the only value the torch forward returns).
        # 'final' is packed first in its layer, so this K slice is a whole
        # 128-aligned slab block; W2 has zero rows beyond h_final.
        hn_f = slab[:, f_base:f_base + k2].astype(bf16)
        p2 = p2_ref[...]
        a = jnp.tanh(jnp.dot(hn_f, w2_ref[...],
                             preferred_element_type=jnp.float32) + p2[0:1, :])
        mu2, var2 = bn_stats(a)
        out_ref[...] = ((a - mu2) * (p2[1:2, :] * jax.lax.rsqrt(var2 + BN_EPS))
                        + p2[2:3, :])

    return kernel


def build_forward(preds, term_dim, mie, layers, params, input_dim, batch):
    packed, meta = pack_dag(preds, term_dim, mie, layers, params, input_dim)
    num_layers = len(layers)
    xpad, slab_w = meta["xpad"], meta["slab_w"]

    # Pad the batch to a sublane multiple (masked BN keeps whole-batch stats).
    # TODO(synk): for real workloads round up to the MXU M dim (128 on v5e,
    # 256 on v6e/v7x) for full MXU-row utilization; semantics are unchanged.
    batch_pad = _round_up(batch, SUBLANE)
    kernel = _make_dag_kernel(meta, num_layers, batch_pad, batch)

    # Generation-aware VMEM budget: actual packed bytes + slab + I/O, with
    # headroom, capped below the physical VMEM of the current chip generation.
    need = 4 * batch_pad * (xpad + slab_w + LANE)
    need += sum(int(np.prod(a.shape)) * a.dtype.itemsize for a in packed)
    try:
        cap = int(pltpu.get_tpu_info().vmem_capacity_bytes)
    except Exception:
        cap = 64 * 1024 * 1024
    vmem_limit = int(min(max(2 * need, 32 * 1024 * 1024), 0.75 * cap))

    vmem = pl.BlockSpec(memory_space=pltpu.MemorySpace.VMEM)
    fused = pl.pallas_call(
        kernel,
        out_shape=jax.ShapeDtypeStruct((batch_pad, LANE), jnp.float32),
        in_specs=[vmem] * (1 + len(packed)),
        out_specs=vmem,
        scratch_shapes=[pltpu.VMEM((batch_pad, slab_w), jnp.float32)],
        compiler_params=pltpu.CompilerParams(vmem_limit_bytes=vmem_limit),
    )

    @jax.jit
    def forward(x, *weights):
        # Lane-dense padded x built in the wrapper -> single unmasked store of
        # the x operand; the kernel never does a sub-128-lane write for x.
        xp = jnp.pad(x.astype(jnp.float32),
                     ((0, batch_pad - batch), (0, xpad - input_dim)))
        return fused(xp, *weights)[:batch, :2]

    return forward, packed


# ---------------------------------------------------------------------------
# Plain-JAX per-term reference (mirrors the torch forward).  It applies the
# same bf16 rounding to the matmul operands as the kernel, so the comparison
# isolates packing/offset/BN correctness from quantization error.
# ---------------------------------------------------------------------------
def reference_forward(x, layers, preds, mie, params):
    bf16 = jnp.bfloat16
    mie_set = set(mie)
    term_out = {}
    aux = {}
    for layer in layers:
        for t in layer:
            inp = x if t in mie_set else jnp.concatenate(
                [term_out[c] for c in preds[t]], axis=1)
            p = params[t]
            z = jnp.dot(inp.astype(bf16), p["w1"].astype(bf16),
                        preferred_element_type=jnp.float32) + p["b1"]
            h = jnp.tanh(z)
            mu = jnp.mean(h, axis=0, keepdims=True)
            var = jnp.mean((h - mu) ** 2, axis=0, keepdims=True)
            hn = (h - mu) * jax.lax.rsqrt(var + BN_EPS) * p["g1"] + p["be1"]
            term_out[t] = hn
            a = jnp.tanh(jnp.dot(hn.astype(bf16), p["w2"].astype(bf16),
                                 preferred_element_type=jnp.float32) + p["b2"])
            mu2 = jnp.mean(a, axis=0, keepdims=True)
            var2 = jnp.mean((a - mu2) ** 2, axis=0, keepdims=True)
            aux[t] = (a - mu2) * jax.lax.rsqrt(var2 + BN_EPS) * p["g2"] + p["be2"]
    return aux["final"]


if __name__ == "__main__":
    # Small synthetic DAG containing a 'final' node.
    # Edges are child -> parent (predecessors of a node are its children).
    nodes = ["leaf1", "leaf2", "mid", "final"]
    edges = [("leaf1", "mid"), ("leaf2", "mid"),
             ("mid", "final"), ("leaf2", "final")]

    batch = 6            # deliberately not a sublane multiple: exercises the
                         # masked-BN batch-padding path (padded to 8 in-kernel)
    input_dim = 16
    num_hiddens_ratio = 4

    preds, term_dim, mie, layers, in_size = build_model_structure(
        nodes, edges, input_dim, num_hiddens_ratio)

    key = jax.random.PRNGKey(0)
    key, k_param, k_x = jax.random.split(key, 3)
    params = init_params(k_param, nodes, term_dim, in_size)
    x = jax.random.normal(k_x, (batch, input_dim), jnp.float32)

    forward, packed = build_forward(preds, term_dim, mie, layers, params,
                                    input_dim, batch)
    y = jax.block_until_ready(forward(x, *packed))
    assert y.shape == (batch, 2), y.shape
    assert bool(jnp.all(jnp.isfinite(y)))

    y_ref = jax.block_until_ready(reference_forward(x, layers, preds, mie, params))
    err = float(jnp.max(jnp.abs(y - y_ref)))
    # bf16-consistent reference -> typical error ~1e-4; 2e-2 tolerance leaves
    # headroom for bf16 rounding-boundary flips amplified through BN's 1/std
    # while still catching any packing / offset / BN-masking bug (O(1) error).
    assert err < 2e-2, f"max abs err vs per-term reference: {err}"
    print("KERNEL_OK")
</pallas_src>

<mosaic_0001>
module attributes {stable_mosaic.version = 11 : i64} {
  func.func @kernel(%arg0: memref<8x128xf32, #tpu.memory_space<vmem>>, %arg1: memref<128x128xbf16, #tpu.memory_space<vmem>>, %arg2: memref<3x128xf32, #tpu.memory_space<vmem>>, %arg3: memref<128x128xbf16, #tpu.memory_space<vmem>>, %arg4: memref<3x128xf32, #tpu.memory_space<vmem>>, %arg5: memref<256x128xbf16, #tpu.memory_space<vmem>>, %arg6: memref<3x128xf32, #tpu.memory_space<vmem>>, %arg7: memref<128x128xbf16, #tpu.memory_space<vmem>>, %arg8: memref<3x128xf32, #tpu.memory_space<vmem>>, %arg9: memref<8x128xf32, #tpu.memory_space<vmem>>, %arg10: memref<8x384xf32, #tpu.memory_space<vmem>>) attributes {dimension_semantics = [], scalar_prefetch = 0 : i64, scratch_operands = 1 : i64, tpu.core_type = #tpu.core_type<tc>} {
    %0 = tpu.iota {dimensions = array<i32: 0>} : vector<8x1xi32>
    %c6_i32 = arith.constant 6 : i32
    %1 = vector.broadcast %c6_i32 : i32 to vector<8x1xi32>
    %2 = arith.cmpi slt, %0, %1 : vector<8x1xi32>
    %3 = arith.extui %2 : vector<8x1xi1> to vector<8x1xi32>
    %4 = arith.sitofp %3 : vector<8x1xi32> to vector<8x1xf32>
    %c0 = arith.constant 0 : index
    %c0_0 = arith.constant 0 : index
    %5 = vector.load %arg1[%c0, %c0_0] : memref<128x128xbf16, #tpu.memory_space<vmem>>, vector<128x128xbf16>
    %c0_1 = arith.constant 0 : index
    %c0_2 = arith.constant 0 : index
    %6 = vector.load %arg2[%c0_1, %c0_2] : memref<3x128xf32, #tpu.memory_space<vmem>>, vector<3x128xf32>
    %c0_3 = arith.constant 0 : index
    %c0_4 = arith.constant 0 : index
    %7 = vector.load %arg0[%c0_3, %c0_4] : memref<8x128xf32, #tpu.memory_space<vmem>>, vector<8x128xf32>
    %8 = arith.truncf %7 : vector<8x128xf32> to vector<8x128xbf16>
    %cst = arith.constant dense<0.000000e+00> : vector<8x128xf32>
    %9 = tpu.matmul %8, %5, %cst {dimension_numbers = #tpu.dot_dimension_numbers<[1], [0], [0], [1], [0, 0, 1, 1], [], []>} : vector<8x128xbf16>, vector<128x128xbf16>, vector<8x128xf32> -> vector<8x128xf32>
    %10 = vector.extract_strided_slice %6 {offsets = [0, 0], sizes = [1, 128], strides = [1, 1]} : vector<3x128xf32> to vector<1x128xf32>
    %11 = vector.broadcast %10 : vector<1x128xf32> to vector<8x128xf32>
    %12 = arith.addf %9, %11 : vector<8x128xf32>
    %13 = math.tanh %12 : vector<8x128xf32>
    %14 = vector.broadcast %4 : vector<8x1xf32> to vector<8x128xf32>
    %15 = arith.mulf %13, %14 : vector<8x128xf32>
    %cst_5 = arith.constant dense<0.000000e+00> : vector<128xf32>
    %16 = vector.multi_reduction <add>, %15, %cst_5 [0] : vector<8x128xf32> to vector<128xf32>
    %17 = vector.shape_cast %16 : vector<128xf32> to vector<1x128xf32>
    %18 = arith.mulf %15, %13 : vector<8x128xf32>
    %cst_6 = arith.constant dense<0.000000e+00> : vector<128xf32>
    %19 = vector.multi_reduction <add>, %18, %cst_6 [0] : vector<8x128xf32> to vector<128xf32>
    %20 = vector.shape_cast %19 : vector<128xf32> to vector<1x128xf32>
    %cst_7 = arith.constant 0.166666672 : f32
    %21 = vector.broadcast %cst_7 : f32 to vector<1x128xf32>
    %22 = arith.mulf %17, %21 : vector<1x128xf32>
    %cst_8 = arith.constant 0.166666672 : f32
    %23 = vector.broadcast %cst_8 : f32 to vector<1x128xf32>
    %24 = arith.mulf %20, %23 : vector<1x128xf32>
    %25 = arith.mulf %22, %22 : vector<1x128xf32>
    %26 = arith.subf %24, %25 : vector<1x128xf32>
    %cst_9 = arith.constant 0.000000e+00 : f32
    %27 = vector.broadcast %cst_9 : f32 to vector<1x128xf32>
    %28 = arith.maximumf %26, %27 : vector<1x128xf32>
    %29 = vector.extract_strided_slice %6 {offsets = [1, 0], sizes = [1, 128], strides = [1, 1]} : vector<3x128xf32> to vector<1x128xf32>
    %cst_10 = arith.constant 9.99999974E-6 : f32
    %30 = vector.broadcast %cst_10 : f32 to vector<1x128xf32>
    %31 = arith.addf %28, %30 : vector<1x128xf32>
    %32 = math.rsqrt %31 : vector<1x128xf32>
    %33 = arith.mulf %29, %32 : vector<1x128xf32>
    %34 = vector.broadcast %22 : vector<1x128xf32> to vector<8x128xf32>
    %35 = arith.subf %13, %34 : vector<8x128xf32>
    %36 = vector.broadcast %33 : vector<1x128xf32> to vector<8x128xf32>
    %37 = arith.mulf %35, %36 : vector<8x128xf32>
    %38 = vector.extract_strided_slice %6 {offsets = [2, 0], sizes = [1, 128], strides = [1, 1]} : vector<3x128xf32> to vector<1x128xf32>
    %39 = vector.broadcast %38 : vector<1x128xf32> to vector<8x128xf32>
    %40 = arith.addf %37, %39 : vector<8x128xf32>
    %c0_11 = arith.constant 0 : index
    %c0_12 = arith.constant 0 : index
    %41 = vector.load %arg10[%c0_11, %c0_12] : memref<8x384xf32, #tpu.memory_space<vmem>>, vector<8x128xf32>
    tpu.vector_store %arg10[%c0_11, %c0_12], %40 {strides = array<i32>} : memref<8x384xf32, #tpu.memory_space<vmem>>, vector<8x128xf32>,
    %c0_13 = arith.constant 0 : index
    %c0_14 = arith.constant 0 : index
    %42 = vector.load %arg3[%c0_13, %c0_14] : memref<128x128xbf16, #tpu.memory_space<vmem>>, vector<128x128xbf16>
    %c0_15 = arith.constant 0 : index
    %c0_16 = arith.constant 0 : index
    %43 = vector.load %arg4[%c0_15, %c0_16] : memref<3x128xf32, #tpu.memory_space<vmem>>, vector<3x128xf32>
    %c0_17 = arith.constant 0 : index
    %c0_18 = arith.constant 0 : index
    %44 = vector.load %arg10[%c0_17, %c0_18] : memref<8x384xf32, #tpu.memory_space<vmem>>, vector<8x128xf32>
    %45 = arith.truncf %44 : vector<8x128xf32> to vector<8x128xbf16>
    %cst_19 = arith.constant dense<0.000000e+00> : vector<8x128xf32>
    %46 = tpu.matmul %45, %42, %cst_19 {dimension_numbers = #tpu.dot_dimension_numbers<[1], [0], [0], [1], [0, 0, 1, 1], [], []>} : vector<8x128xbf16>, vector<128x128xbf16>, vector<8x128xf32> -> vector<8x128xf32>
    %47 = vector.extract_strided_slice %43 {offsets = [0, 0], sizes = [1, 128], strides = [1, 1]} : vector<3x128xf32> to vector<1x128xf32>
    %48 = vector.broadcast %47 : vector<1x128xf32> to vector<8x128xf32>
    %49 = arith.addf %46, %48 : vector<8x128xf32>
    %50 = math.tanh %49 : vector<8x128xf32>
    %51 = vector.broadcast %4 : vector<8x1xf32> to vector<8x128xf32>
    %52 = arith.mulf %50, %51 : vector<8x128xf32>
    %cst_20 = arith.constant dense<0.000000e+00> : vector<128xf32>
    %53 = vector.multi_reduction <add>, %52, %cst_20 [0] : vector<8x128xf32> to vector<128xf32>
    %54 = vector.shape_cast %53 : vector<128xf32> to vector<1x128xf32>
    %55 = arith.mulf %52, %50 : vector<8x128xf32>
    %cst_21 = arith.constant dense<0.000000e+00> : vector<128xf32>
    %56 = vector.multi_reduction <add>, %55, %cst_21 [0] : vector<8x128xf32> to vector<128xf32>
    %57 = vector.shape_cast %56 : vector<128xf32> to vector<1x128xf32>
    %cst_22 = arith.constant 0.166666672 : f32
    %58 = vector.broadcast %cst_22 : f32 to vector<1x128xf32>
    %59 = arith.mulf %54, %58 : vector<1x128xf32>
    %cst_23 = arith.constant 0.166666672 : f32
    %60 = vector.broadcast %cst_23 : f32 to vector<1x128xf32>
    %61 = arith.mulf %57, %60 : vector<1x128xf32>
    %62 = arith.mulf %59, %59 : vector<1x128xf32>
    %63 = arith.subf %61, %62 : vector<1x128xf32>
    %cst_24 = arith.constant 0.000000e+00 : f32
    %64 = vector.broadcast %cst_24 : f32 to vector<1x128xf32>
    %65 = arith.maximumf %63, %64 : vector<1x128xf32>
    %66 = vector.extract_strided_slice %43 {offsets = [1, 0], sizes = [1, 128], strides = [1, 1]} : vector<3x128xf32> to vector<1x128xf32>
    %cst_25 = arith.constant 9.99999974E-6 : f32
    %67 = vector.broadcast %cst_25 : f32 to vector<1x128xf32>
    %68 = arith.addf %65, %67 : vector<1x128xf32>
    %69 = math.rsqrt %68 : vector<1x128xf32>
    %70 = arith.mulf %66, %69 : vector<1x128xf32>
    %71 = vector.broadcast %59 : vector<1x128xf32> to vector<8x128xf32>
    %72 = arith.subf %50, %71 : vector<8x128xf32>
    %73 = vector.broadcast %70 : vector<1x128xf32> to vector<8x128xf32>
    %74 = arith.mulf %72, %73 : vector<8x128xf32>
    %75 = vector.extract_strided_slice %43 {offsets = [2, 0], sizes = [1, 128], strides = [1, 1]} : vector<3x128xf32> to vector<1x128xf32>
    %76 = vector.broadcast %75 : vector<1x128xf32> to vector<8x128xf32>
    %77 = arith.addf %74, %76 : vector<8x128xf32>
    %c0_26 = arith.constant 0 : index
    %c128 = arith.constant 128 : index
    %78 = vector.load %arg10[%c0_26, %c128] : memref<8x384xf32, #tpu.memory_space<vmem>>, vector<8x128xf32>
    tpu.vector_store %arg10[%c0_26, %c128], %77 {strides = array<i32>} : memref<8x384xf32, #tpu.memory_space<vmem>>, vector<8x128xf32>,
    %c0_27 = arith.constant 0 : index
    %c0_28 = arith.constant 0 : index
    %79 = vector.load %arg5[%c0_27, %c0_28] : memref<256x128xbf16, #tpu.memory_space<vmem>>, vector<256x128xbf16>
    %c0_29 = arith.constant 0 : index
    %c0_30 = arith.constant 0 : index
    %80 = vector.load %arg6[%c0_29, %c0_30] : memref<3x128xf32, #tpu.memory_space<vmem>>, vector<3x128xf32>
    %c0_31 = arith.constant 0 : index
    %c0_32 = arith.constant 0 : index
    %81 = vector.load %arg10[%c0_31, %c0_32] : memref<8x384xf32, #tpu.memory_space<vmem>>, vector<8x256xf32>
    %82 = arith.truncf %81 : vector<8x256xf32> to vector<8x256xbf16>
    %cst_33 = arith.constant dense<0.000000e+00> : vector<8x128xf32>
    %83 = tpu.matmul %82, %79, %cst_33 {dimension_numbers = #tpu.dot_dimension_numbers<[1], [0], [0], [1], [0, 0, 1, 1], [], []>} : vector<8x256xbf16>, vector<256x128xbf16>, vector<8x128xf32> -> vector<8x128xf32>
    %84 = vector.extract_strided_slice %80 {offsets = [0, 0], sizes = [1, 128], strides = [1, 1]} : vector<3x128xf32> to vector<1x128xf32>
    %85 = vector.broadcast %84 : vector<1x128xf32> to vector<8x128xf32>
    %86 = arith.addf %83, %85 : vector<8x128xf32>
    %87 = math.tanh %86 : vector<8x128xf32>
    %88 = vector.broadcast %4 : vector<8x1xf32> to vector<8x128xf32>
    %89 = arith.mulf %87, %88 : vector<8x128xf32>
    %cst_34 = arith.constant dense<0.000000e+00> : vector<128xf32>
    %90 = vector.multi_reduction <add>, %89, %cst_34 [0] : vector<8x128xf32> to vector<128xf32>
    %91 = vector.shape_cast %90 : vector<128xf32> to vector<1x128xf32>
    %92 = arith.mulf %89, %87 : vector<8x128xf32>
    %cst_35 = arith.constant dense<0.000000e+00> : vector<128xf32>
    %93 = vector.multi_reduction <add>, %92, %cst_35 [0] : vector<8x128xf32> to vector<128xf32>
    %94 = vector.shape_cast %93 : vector<128xf32> to vector<1x128xf32>
    %cst_36 = arith.constant 0.166666672 : f32
    %95 = vector.broadcast %cst_36 : f32 to vector<1x128xf32>
    %96 = arith.mulf %91, %95 : vector<1x128xf32>
    %cst_37 = arith.constant 0.166666672 : f32
    %97 = vector.broadcast %cst_37 : f32 to vector<1x128xf32>
    %98 = arith.mulf %94, %97 : vector<1x128xf32>
    %99 = arith.mulf %96, %96 : vector<1x128xf32>
    %100 = arith.subf %98, %99 : vector<1x128xf32>
    %cst_38 = arith.constant 0.000000e+00 : f32
    %101 = vector.broadcast %cst_38 : f32 to vector<1x128xf32>
    %102 = arith.maximumf %100, %101 : vector<1x128xf32>
    %103 = vector.extract_strided_slice %80 {offsets = [1, 0], sizes = [1, 128], strides = [1, 1]} : vector<3x128xf32> to vector<1x128xf32>
    %cst_39 = arith.constant 9.99999974E-6 : f32
    %104 = vector.broadcast %cst_39 : f32 to vector<1x128xf32>
    %105 = arith.addf %102, %104 : vector<1x128xf32>
    %106 = math.rsqrt %105 : vector<1x128xf32>
    %107 = arith.mulf %103, %106 : vector<1x128xf32>
    %108 = vector.broadcast %96 : vector<1x128xf32> to vector<8x128xf32>
    %109 = arith.subf %87, %108 : vector<8x128xf32>
    %110 = vector.broadcast %107 : vector<1x128xf32> to vector<8x128xf32>
    %111 = arith.mulf %109, %110 : vector<8x128xf32>
    %112 = vector.extract_strided_slice %80 {offsets = [2, 0], sizes = [1, 128], strides = [1, 1]} : vector<3x128xf32> to vector<1x128xf32>
    %113 = vector.broadcast %112 : vector<1x128xf32> to vector<8x128xf32>
    %114 = arith.addf %111, %113 : vector<8x128xf32>
    %c0_40 = arith.constant 0 : index
    %c256 = arith.constant 256 : index
    %115 = vector.load %arg10[%c0_40, %c256] : memref<8x384xf32, #tpu.memory_space<vmem>>, vector<8x128xf32>
    tpu.vector_store %arg10[%c0_40, %c256], %114 {strides = array<i32>} : memref<8x384xf32, #tpu.memory_space<vmem>>, vector<8x128xf32>,
    %c0_41 = arith.constant 0 : index
    %c256_42 = arith.constant 256 : index
    %116 = vector.load %arg10[%c0_41, %c256_42] : memref<8x384xf32, #tpu.memory_space<vmem>>, vector<8x128xf32>
    %117 = arith.truncf %116 : vector<8x128xf32> to vector<8x128xbf16>
    %c0_43 = arith.constant 0 : index
    %c0_44 = arith.constant 0 : index
    %118 = vector.load %arg8[%c0_43, %c0_44] : memref<3x128xf32, #tpu.memory_space<vmem>>, vector<3x128xf32>
    %c0_45 = arith.constant 0 : index
    %c0_46 = arith.constant 0 : index
    %119 = vector.load %arg7[%c0_45, %c0_46] : memref<128x128xbf16, #tpu.memory_space<vmem>>, vector<128x128xbf16>
    %cst_47 = arith.constant dense<0.000000e+00> : vector<8x128xf32>
    %120 = tpu.matmul %117, %119, %cst_47 {dimension_numbers = #tpu.dot_dimension_numbers<[1], [0], [0], [1], [0, 0, 1, 1], [], []>} : vector<8x128xbf16>, vector<128x128xbf16>, vector<8x128xf32> -> vector<8x128xf32>
    %121 = vector.extract_strided_slice %118 {offsets = [0, 0], sizes = [1, 128], strides = [1, 1]} : vector<3x128xf32> to vector<1x128xf32>
    %122 = vector.broadcast %121 : vector<1x128xf32> to vector<8x128xf32>
    %123 = arith.addf %120, %122 : vector<8x128xf32>
    %124 = math.tanh %123 : vector<8x128xf32>
    %125 = vector.broadcast %4 : vector<8x1xf32> to vector<8x128xf32>
    %126 = arith.mulf %124, %125 : vector<8x128xf32>
    %cst_48 = arith.constant dense<0.000000e+00> : vector<128xf32>
    %127 = vector.multi_reduction <add>, %126, %cst_48 [0] : vector<8x128xf32> to vector<128xf32>
    %128 = vector.shape_cast %127 : vector<128xf32> to vector<1x128xf32>
    %129 = arith.mulf %126, %124 : vector<8x128xf32>
    %cst_49 = arith.constant dense<0.000000e+00> : vector<128xf32>
    %130 = vector.multi_reduction <add>, %129, %cst_49 [0] : vector<8x128xf32> to vector<128xf32>
    %131 = vector.shape_cast %130 : vector<128xf32> to vector<1x128xf32>
    %cst_50 = arith.constant 0.166666672 : f32
    %132 = vector.broadcast %cst_50 : f32 to vector<1x128xf32>
    %133 = arith.mulf %128, %132 : vector<1x128xf32>
    %cst_51 = arith.constant 0.166666672 : f32
    %134 = vector.broadcast %cst_51 : f32 to vector<1x128xf32>
    %135 = arith.mulf %131, %134 : vector<1x128xf32>
    %136 = arith.mulf %133, %133 : vector<1x128xf32>
    %137 = arith.subf %135, %136 : vector<1x128xf32>
    %cst_52 = arith.constant 0.000000e+00 : f32
    %138 = vector.broadcast %cst_52 : f32 to vector<1x128xf32>
    %139 = arith.maximumf %137, %138 : vector<1x128xf32>
    %140 = vector.broadcast %133 : vector<1x128xf32> to vector<8x128xf32>
    %141 = arith.subf %124, %140 : vector<8x128xf32>
    %142 = vector.extract_strided_slice %118 {offsets = [1, 0], sizes = [1, 128], strides = [1, 1]} : vector<3x128xf32> to vector<1x128xf32>
    %cst_53 = arith.constant 9.99999974E-6 : f32
    %143 = vector.broadcast %cst_53 : f32 to vector<1x128xf32>
    %144 = arith.addf %139, %143 : vector<1x128xf32>
    %145 = math.rsqrt %144 : vector<1x128xf32>
    %146 = arith.mulf %142, %145 : vector<1x128xf32>
    %147 = vector.broadcast %146 : vector<1x128xf32> to vector<8x128xf32>
    %148 = arith.mulf %141, %147 : vector<8x128xf32>
    %149 = vector.extract_strided_slice %118 {offsets = [2, 0], sizes = [1, 128], strides = [1, 1]} : vector<3x128xf32> to vector<1x128xf32>
    %150 = vector.broadcast %149 : vector<1x128xf32> to vector<8x128xf32>
    %151 = arith.addf %148, %150 : vector<8x128xf32>
    %c0_54 = arith.constant 0 : index
    %c0_55 = arith.constant 0 : index
    %152 = vector.load %arg9[%c0_54, %c0_55] : memref<8x128xf32, #tpu.memory_space<vmem>>, vector<8x128xf32>
    tpu.vector_store %arg9[%c0_54, %c0_55], %151 {strides = array<i32>} : memref<8x128xf32, #tpu.memory_space<vmem>>, vector<8x128xf32>,
    return
  }
}

</mosaic_0001>

<llo_original>
// kernel: forward.1
$region0: #{forward.1}
  #allocation0 [shape = 'u32[]', space=smem, size = 0x4, offset = 0x4, fixed_abs, tag = 'smem constant byte address 0x4 - core index']
  #allocation1 [shape = 'u32[144,128]{1,0:T(1,128)}', space=vmem, size = 0x12000, scoped, tag = 'internal scratch']
  #allocation2 [shape = 'f32[8,384]{1,0:T(8,128)}', space=vmem, size = 0x3000, scoped, tag = 'scratch operand']
  %s0 = inlined_call_operand.vmem [shape: f32[8,128], index: 0, kind: input, shape index: {}]
  %s1 = inlined_call_operand.hbm [shape: bf16[128,128], index: 1, kind: input, shape index: {}]
  %s2 = inlined_call_operand.vmem [shape: f32[3,128], index: 2, kind: input, shape index: {}]
  %s3 = inlined_call_operand.hbm [shape: bf16[128,128], index: 3, kind: input, shape index: {}]
  %s4 = inlined_call_operand.vmem [shape: f32[3,128], index: 4, kind: input, shape index: {}]
  %s5 = inlined_call_operand.hbm [shape: bf16[256,128], index: 5, kind: input, shape index: {}]
  %s6 = inlined_call_operand.vmem [shape: f32[3,128], index: 6, kind: input, shape index: {}]
  %s7 = inlined_call_operand.hbm [shape: bf16[128,128], index: 7, kind: input, shape index: {}]
  %s8 = inlined_call_operand.vmem [shape: f32[3,128], index: 8, kind: input, shape index: {}]
  %s9 = inlined_call_operand.vmem [shape: f32[8,128], index: 9, kind: output, shape index: {}]
  %s10 = sld [smem:[#allocation0]]
  $region62: #{forward.1} parent=0
    _
  %s12 = ssub.s32 1, %s10
  %s13 = scalar_select 0, %s12, %s10
  $region1: #{forward.1} parent=0
    #allocation3 [shape = 'u8[32768]{0}', space=vmem, size = 0x8000, scoped, tag = 'input window, operand 1, single buffered']
    #allocation4 [shape = 's32[1]{0}', space=sflag, size = 0x4, scoped, tag = 'scoped memory for forward.1']
    #allocation5 [shape = 'u8[32768]{0}', space=vmem, size = 0x8000, scoped, tag = 'input window, operand 3, single buffered']
    #allocation6 [shape = 's32[1]{0}', space=sflag, size = 0x4, scoped, tag = 'scoped memory for forward.1']
    #allocation7 [shape = 'u8[65536]{0}', space=vmem, size = 0x10000, scoped, tag = 'input window, operand 5, single buffered']
    #allocation8 [shape = 'u8[32768]{0}', space=vmem, size = 0x8000, scoped, tag = 'input window, operand 7, single buffered']
    #allocation9 [shape = 's32[1]{0}', space=sflag, size = 0x4, scoped, tag = 'scoped memory for forward.1']
    %14 = vsyncpa [#allocation4], 0
    %15 = vsyncpa [#allocation6], 0
    %16 = vsyncpa [#allocation9], 0
    // Predicated region
    $region2: #{forward.1} parent=1 // pred_check
      _
    $region3: #{forward.1} parent=1 // pred_check_branch
      %18 = sbr.rel (0) target = $region5
    $region4: #{forward.1} parent=1 // pred_region
      _
    $region5: #{forward.1} parent=1 // pred_fallthru
      _
    // Predicated region
    $region6: #{forward.1} parent=1 // pred_check
      _
    $region7: #{forward.1} parent=1 // pred_check_branch
      %20 = sbr.rel (0) target = $region9
    $region8: #{forward.1} parent=1 // pred_region
      %s22 = ssub.s32 1024, 1024
      %23 = vsyncadd [#allocation4], %s22
      %s24 = sshll.u32 [#allocation3], 4
      %s25 = int_to_ptr.vmem [resolvable:$true] %s24
      %30 = dma.hbm_to_vmem [thread:$0]  %s1, 1024, %s25, [#allocation4], 64, 64, 4
    $region9: #{forward.1} parent=1 // pred_fallthru
      _
    // Predicated region
    $region10: #{forward.1} parent=1 // pred_check
      _
    $region11: #{forward.1} parent=1 // pred_check_branch
      %32 = sbr.rel (0) target = $region13
    $region12: #{forward.1} parent=1 // pred_region
      _
    $region13: #{forward.1} parent=1 // pred_fallthru
      _
    // Predicated region
    $region14: #{forward.1} parent=1 // pred_check
      _
    $region15: #{forward.1} parent=1 // pred_check_branch
      %34 = sbr.rel (0) target = $region17
    $region16: #{forward.1} parent=1 // pred_region
      %s36 = ssub.s32 1024, 1024
      %37 = vsyncadd [#allocation6], %s36
      %s38 = sshll.u32 [#allocation5], 4
      %s39 = int_to_ptr.vmem [resolvable:$true] %s38
      %44 = dma.hbm_to_vmem [thread:$0]  %s3, 1024, %s39, [#allocation6], 64, 64, 4
    $region17: #{forward.1} parent=1 // pred_fallthru
      _
    // Predicated region
    $region18: #{forward.1} parent=1 // pred_check
      _
    $region19: #{forward.1} parent=1 // pred_check_branch
      %46 = sbr.rel (0) target = $region21
    $region20: #{forward.1} parent=1 // pred_region
      _
    $region21: #{forward.1} parent=1 // pred_fallthru
      _
    // Predicated region
    $region22: #{forward.1} parent=1 // pred_check
      _
    $region23: #{forward.1} parent=1 // pred_check_branch
      %48 = sbr.rel (0) target = $region25
    $region24: #{forward.1} parent=1 // pred_region
      %s50 = ssub.s32 2048, 2048
      %51 = vsyncadd [#allocation6], %s50
      %s52 = sshll.u32 [#allocation7], 4
      %s53 = int_to_ptr.vmem [resolvable:$true] %s52
      %58 = dma.hbm_to_vmem [thread:$0]  %s5, 2048, %s53, [#allocation6], 64, 64, 4
    $region25: #{forward.1} parent=1 // pred_fallthru
      _
    // Predicated region
    $region26: #{forward.1} parent=1 // pred_check
      _
    $region27: #{forward.1} parent=1 // pred_check_branch
      %60 = sbr.rel (0) target = $region29
    $region28: #{forward.1} parent=1 // pred_region
      _
    $region29: #{forward.1} parent=1 // pred_fallthru
      _
    // Predicated region
    $region30: #{forward.1} parent=1 // pred_check
      _
    $region31: #{forward.1} parent=1 // pred_check_branch
      %62 = sbr.rel (0) target = $region33
    $region32: #{forward.1} parent=1 // pred_region
      %s64 = ssub.s32 1024, 1024
      %65 = vsyncadd [#allocation9], %s64
      %s66 = sshll.u32 [#allocation8], 4
      %s67 = int_to_ptr.vmem [resolvable:$true] %s66
      %72 = dma.hbm_to_vmem [thread:$0]  %s7, 1024, %s67, [#allocation9], 64, 64, 4
    $region33: #{forward.1} parent=1 // pred_fallthru
      _
    // Predicated region
    $region34: #{forward.1} parent=1 // pred_check
      _
    $region35: #{forward.1} parent=1 // pred_check_branch
      %74 = sbr.rel (0) target = $region37
    $region36: #{forward.1} parent=1 // pred_region
      _
    $region37: #{forward.1} parent=1 // pred_fallthru
      _
    // Predicated region
    $region38: #{forward.1} parent=1 // pred_check
      _
    $region39: #{forward.1} parent=1 // pred_check_branch
      %76 = sbr.rel (0) target = $region41
    $region40: #{forward.1} parent=1 // pred_region
      %77 = dma.done [#allocation4], 1024
    $region41: #{forward.1} parent=1 // pred_fallthru
      _
    // Predicated region
    $region42: #{forward.1} parent=1 // pred_check
      _
    $region43: #{forward.1} parent=1 // pred_check_branch
      %79 = sbr.rel (0) target = $region45
    $region44: #{forward.1} parent=1 // pred_region
      %80 = dma.done [#allocation6], 1024
    $region45: #{forward.1} parent=1 // pred_fallthru
      _
    // Predicated region
    $region46: #{forward.1} parent=1 // pred_check
      _
    $region47: #{forward.1} parent=1 // pred_check_branch
      %82 = sbr.rel (0) target = $region49
    $region48: #{forward.1} parent=1 // pred_region
      %83 = dma.done [#allocation6], 2048
    $region49: #{forward.1} parent=1 // pred_fallthru
      _
    // Predicated region
    $region50: #{forward.1} parent=1 // pred_check
      _
    $region51: #{forward.1} parent=1 // pred_check_branch
      %85 = sbr.rel (0) target = $region53
    $region52: #{forward.1} parent=1 // pred_region
      %86 = dma.done [#allocation9], 1024
    $region53: #{forward.1} parent=1 // pred_fallthru
      _
    %v88 = vlaneseq
    %v89 = vshrl.u32 %v88, 7
    %vm90 = vcmp.lt.s32.totalorder %v89, 6
    %v91 = vsel %vm90, 1, 0
    %v92 = vcvt.s32.f32 %v91
    %v93 = vld [vmem:[#allocation3] sm:$0xf]
    %v94 = vld [vmem:[#allocation3 + $0x4] sm:$0xf]
    %v95 = vld [vmem:[#allocation3 + $0x8] sm:$0xf]
    %v96 = vld [vmem:[#allocation3 + $0xc] sm:$0xf]
    %v97 = vld [vmem:[#allocation3 + $0x10] sm:$0xf]
    %v98 = vld [vmem:[#allocation3 + $0x14] sm:$0xf]
    %v99 = vld [vmem:[#allocation3 + $0x18] sm:$0xf]
    %v100 = vld [vmem:[#allocation3 + $0x1c] sm:$0xf]
    %v101 = vld [vmem:[#allocation3 + $0x20] sm:$0xf]
    %v102 = vld [vmem:[#allocation3 + $0x24] sm:$0xf]
    %v103 = vld [vmem:[#allocation3 + $0x28] sm:$0xf]
    %v104 = vld [vmem:[#allocation3 + $0x2c] sm:$0xf]
    %v105 = vld [vmem:[#allocation3 + $0x30] sm:$0xf]
    %v106 = vld [vmem:[#allocation3 + $0x34] sm:$0xf]
    %v107 = vld [vmem:[#allocation3 + $0x38] sm:$0xf]
    %v108 = vld [vmem:[#allocation3 + $0x3c] sm:$0xf]
    %v109 = vld [vmem:[%s2] sm:$0x7]
    %v110 = vld [vmem:[%s0] sm:$0xff]
    %v111 = vpack.c.bf16 %v110, %v110
    %v112 = vlaneseq
    %v113 = vshrl.u32 %v112, 7
    %v114 = vsub.s32 0, %v113
    %v115 = vrot.slane %v109, %v114
    %v132 = vunpack.c.l.b16 %v93
    %v133 = vunpack.c.l.b16 %v94
    %v134 = vunpack.c.l.b16 %v95
    %v135 = vunpack.c.l.b16 %v96
    %v136 = vunpack.c.l.b16 %v97
    %v137 = vunpack.c.l.b16 %v98
    %v138 = vunpack.c.l.b16 %v99
    %v139 = vunpack.c.l.b16 %v100
    %v140 = vunpack.c.l.b16 %v101
    %v141 = vunpack.c.l.b16 %v102
    %v142 = vunpack.c.l.b16 %v103
    %v143 = vunpack.c.l.b16 %v104
    %v144 = vunpack.c.l.b16 %v105
    %v145 = vunpack.c.l.b16 %v106
    %v146 = vunpack.c.l.b16 %v107
    %v147 = vunpack.c.l.b16 %v108
    %v148 = vpack.c.b16 %v133, %v132
    %v149 = vpack.c.b16 %v135, %v134
    %v150 = vpack.c.b16 %v137, %v136
    %v151 = vpack.c.b16 %v139, %v138
    %v152 = vpack.c.b16 %v141, %v140
    %v153 = vpack.c.b16 %v143, %v142
    %v154 = vpack.c.b16 %v145, %v144
    %v155 = vpack.c.b16 %v147, %v146
    %164 = vmatprep.subr.bf16.mxu0 0
    %165 = vmatpush1.bf16.msra.mxu0 %v155
    %166 = vmatprep.subr.bf16.mxu0 0
    %167 = vmatpush1.bf16.msra.mxu0 %v154
    %168 = vmatprep.subr.bf16.mxu0 0
    %169 = vmatpush1.bf16.msra.mxu0 %v153
    %170 = vmatprep.subr.bf16.mxu0 0
    %171 = vmatpush1.bf16.msra.mxu0 %v152
    %172 = vmatprep.subr.bf16.mxu0 0
    %173 = vmatpush1.bf16.msra.mxu0 %v151
    %174 = vmatprep.subr.bf16.mxu0 0
    %175 = vmatpush1.bf16.msra.mxu0 %v150
    %176 = vmatprep.subr.bf16.mxu0 0
    %177 = vmatpush1.bf16.msra.mxu0 %v149
    %178 = vmatprep.subr.bf16.mxu0 0
    %179 = vmatpush1.bf16.msra.mxu0 %v148
    %180 = vmatprep.subr.bf16.mxu0 0
    %181 = vmatpush2.bf16.msra.mxu0 0
    %182 = vmatprep.subr.bf16.mxu0 0
    %183 = vmatpush2.bf16.msra.mxu0 0
    %184 = vmatprep.subr.bf16.mxu0 0
    %185 = vmatpush2.bf16.msra.mxu0 0
    %186 = vmatprep.subr.bf16.mxu0 0
    %187 = vmatpush2.bf16.msra.mxu0 0
    %188 = vmatprep.subr.bf16.mxu0 0
    %189 = vmatpush2.bf16.msra.mxu0 0
    %190 = vmatprep.subr.bf16.mxu0 0
    %191 = vmatpush2.bf16.msra.mxu0 0
    %192 = vmatprep.subr.bf16.mxu0 0
    %193 = vmatpush2.bf16.msra.mxu0 0
    %194 = vmatprep.subr.bf16.mxu0 0
    %195 = vmatpush2.bf16.msra.mxu0 0
    %196 = vmatprep.mubr.bf16.mxu0 0
    %197 = vmatmul.mubr.bf16.gmra.mxu0 %v111
    %v198 = vpop.f32.mrf.mxu0
    %v199 = vadd.f32 %v115, %v198
    %v200 = vpop.f32.mrf.mxu0
    %v201 = vpop.f32.mrf.mxu0
    %v202 = vpop.f32.mrf.mxu0
    %203 = vdwg.mxu0
    %v204 = vtanh.pop %v199
    %v205 = vmul.f32 %v204, %v92
    %v206 = vrot.slane %v205, 4
    %v207 = vadd.f32 %v205, %v206
    %v208 = vrot.slane %v207, 2
    %v209 = vadd.f32 %v207, %v208
    %v210 = vrot.slane %v209, 1
    %v211 = vadd.f32 %v209, %v210
    %v212 = vmul.f32 %v205, %v204
    %v213 = vrot.slane %v212, 4
    %v214 = vadd.f32 %v212, %v213
    %v215 = vrot.slane %v214, 2
    %v216 = vadd.f32 %v214, %v215
    %v217 = vrot.slane %v216, 1
    %v218 = vadd.f32 %v216, %v217
    %v219 = vmul.f32 %v211, 0.16666667
    %v220 = vmul.f32 %v218, 0.16666667
    %v221 = vmul.f32 %v219, %v219
    %v222 = vsub.f32 %v220, %v221
    %v223 = vmax.f32 %v222, 0.0
    %v224 = vadd.f32 %v223, 1e-05
    %v225 = vrsqrt.pop %v224
    %v226 = vmul.f32 %v109, %v225
    %v227 = vsub.f32 %v204, %v219
    %v228 = vlaneseq
    %v229 = vshrl.u32 %v228, 7
    %v230 = vsub.s32 1, %v229
    %v231 = vrot.slane %v226, %v230
    %v232 = vmul.f32 %v227, %v231
    %v233 = vlaneseq
    %v234 = vshrl.u32 %v233, 7
    %v235 = vsub.s32 2, %v234
    %v236 = vrot.slane %v109, %v235
    %v237 = vadd.f32 %v232, %v236
    %238 = vst [vmem:[#allocation2] sm:$0xff] %v237
    %v239 = vld [vmem:[#allocation5] sm:$0xf]
    %v240 = vld [vmem:[#allocation5 + $0x4] sm:$0xf]
    %v241 = vld [vmem:[#allocation5 + $0x8] sm:$0xf]
    %v242 = vld [vmem:[#allocation5 + $0xc] sm:$0xf]
    %v243 = vld [vmem:[#allocation5 + $0x10] sm:$0xf]
    %v244 = vld [vmem:[#allocation5 + $0x14] sm:$0xf]
    %v245 = vld [vmem:[#allocation5 + $0x18] sm:$0xf]
    %v246 = vld [vmem:[#allocation5 + $0x1c] sm:$0xf]
    %v247 = vld [vmem:[#allocation5 + $0x20] sm:$0xf]
    %v248 = vld [vmem:[#allocation5 + $0x24] sm:$0xf]
    %v249 = vld [vmem:[#allocation5 + $0x28] sm:$0xf]
    %v250 = vld [vmem:[#allocation5 + $0x2c] sm:$0xf]
    %v251 = vld [vmem:[#allocation5 + $0x30] sm:$0xf]
    %v252 = vld [vmem:[#allocation5 + $0x34] sm:$0xf]
    %v253 = vld [vmem:[#allocation5 + $0x38] sm:$0xf]
    %v254 = vld [vmem:[#allocation5 + $0x3c] sm:$0xf]
    %v255 = vld [vmem:[%s4] sm:$0x7]
    %v256 = vld [vmem:[#allocation2] sm:$0xff]
    %v257 = vpack.c.bf16 %v256, %v256
    %v258 = vlaneseq
    %v259 = vshrl.u32 %v258, 7
    %v260 = vsub.s32 0, %v259
    %v261 = vrot.slane %v255, %v260
    %v278 = vunpack.c.l.b16 %v239
    %v279 = vunpack.c.l.b16 %v240
    %v280 = vunpack.c.l.b16 %v241
    %v281 = vunpack.c.l.b16 %v242
    %v282 = vunpack.c.l.b16 %v243
    %v283 = vunpack.c.l.b16 %v244
    %v284 = vunpack.c.l.b16 %v245
    %v285 = vunpack.c.l.b16 %v246
    %v286 = vunpack.c.l.b16 %v247
    %v287 = vunpack.c.l.b16 %v248
    %v288 = vunpack.c.l.b16 %v249
    %v289 = vunpack.c.l.b16 %v250
    %v290 = vunpack.c.l.b16 %v251
    %v291 = vunpack.c.l.b16 %v252
    %v292 = vunpack.c.l.b16 %v253
    %v293 = vunpack.c.l.b16 %v254
    %v294 = vpack.c.b16 %v279, %v278
    %v295 = vpack.c.b16 %v281, %v280
    %v296 = vpack.c.b16 %v283, %v282
    %v297 = vpack.c.b16 %v285, %v284
    %v298 = vpack.c.b16 %v287, %v286
    %v299 = vpack.c.b16 %v289, %v288
    %v300 = vpack.c.b16 %v291, %v290
    %v301 = vpack.c.b16 %v293, %v292
    %310 = vmatprep.subr.bf16.mxu0 0
    %311 = vmatpush1.bf16.msra.mxu0 %v301
    %312 = vmatprep.subr.bf16.mxu0 0
    %313 = vmatpush1.bf16.msra.mxu0 %v300
    %314 = vmatprep.subr.bf16.mxu0 0
    %315 = vmatpush1.bf16.msra.mxu0 %v299
    %316 = vmatprep.subr.bf16.mxu0 0
    %317 = vmatpush1.bf16.msra.mxu0 %v298
    %318 = vmatprep.subr.bf16.mxu0 0
    %319 = vmatpush1.bf16.msra.mxu0 %v297
    %320 = vmatprep.subr.bf16.mxu0 0
    %321 = vmatpush1.bf16.msra.mxu0 %v296
    %322 = vmatprep.subr.bf16.mxu0 0
    %323 = vmatpush1.bf16.msra.mxu0 %v295
    %324 = vmatprep.subr.bf16.mxu0 0
    %325 = vmatpush1.bf16.msra.mxu0 %v294
    %326 = vmatprep.subr.bf16.mxu0 0
    %327 = vmatpush2.bf16.msra.mxu0 0
    %328 = vmatprep.subr.bf16.mxu0 0
    %329 = vmatpush2.bf16.msra.mxu0 0
    %330 = vmatprep.subr.bf16.mxu0 0
    %331 = vmatpush2.bf16.msra.mxu0 0
    %332 = vmatprep.subr.bf16.mxu0 0
    %333 = vmatpush2.bf16.msra.mxu0 0
    %334 = vmatprep.subr.bf16.mxu0 0
    %335 = vmatpush2.bf16.msra.mxu0 0
    %336 = vmatprep.subr.bf16.mxu0 0
    %337 = vmatpush2.bf16.msra.mxu0 0
    %338 = vmatprep.subr.bf16.mxu0 0
    %339 = vmatpush2.bf16.msra.mxu0 0
    %340 = vmatprep.subr.bf16.mxu0 0
    %341 = vmatpush2.bf16.msra.mxu0 0
    %342 = vmatprep.mubr.bf16.mxu0 0
    %343 = vmatmul.mubr.bf16.gmra.mxu0 %v257
    %v344 = vpop.f32.mrf.mxu0
    %v345 = vadd.f32 %v261, %v344
    %v346 = vpop.f32.mrf.mxu0
    %v347 = vpop.f32.mrf.mxu0
    %v348 = vpop.f32.mrf.mxu0
    %349 = vdwg.mxu0
    %v350 = vtanh.pop %v345
    %v351 = vmul.f32 %v350, %v92
    %v352 = vrot.slane %v351, 4
    %v353 = vadd.f32 %v351, %v352
    %v354 = vrot.slane %v353, 2
    %v355 = vadd.f32 %v353, %v354
    %v356 = vrot.slane %v355, 1
    %v357 = vadd.f32 %v355, %v356
    %v358 = vmul.f32 %v351, %v350
    %v359 = vrot.slane %v358, 4
    %v360 = vadd.f32 %v358, %v359
    %v361 = vrot.slane %v360, 2
    %v362 = vadd.f32 %v360, %v361
    %v363 = vrot.slane %v362, 1
    %v364 = vadd.f32 %v362, %v363
    %v365 = vmul.f32 %v357, 0.16666667
    %v366 = vmul.f32 %v364, 0.16666667
    %v367 = vmul.f32 %v365, %v365
    %v368 = vsub.f32 %v366, %v367
    %v369 = vmax.f32 %v368, 0.0
    %v370 = vadd.f32 %v369, 1e-05
    %v371 = vrsqrt.pop %v370
    %v372 = vmul.f32 %v255, %v371
    %v373 = vsub.f32 %v350, %v365
    %v374 = vlaneseq
    %v375 = vshrl.u32 %v374, 7
    %v376 = vsub.s32 1, %v375
    %v377 = vrot.slane %v372, %v376
    %v378 = vmul.f32 %v373, %v377
    %v379 = vlaneseq
    %v380 = vshrl.u32 %v379, 7
    %v381 = vsub.s32 2, %v380
    %v382 = vrot.slane %v255, %v381
    %v383 = vadd.f32 %v378, %v382
    %384 = vst [vmem:[#allocation2 + $0x8] sm:$0xff] %v383
    %v385 = vld [vmem:[#allocation7] sm:$0xf]
    %v386 = vld [vmem:[#allocation7 + $0x4] sm:$0xf]
    %v387 = vld [vmem:[#allocation7 + $0x8] sm:$0xf]
    %v388 = vld [vmem:[#allocation7 + $0xc] sm:$0xf]
    %v389 = vld [vmem:[#allocation7 + $0x10] sm:$0xf]
    %v390 = vld [vmem:[#allocation7 + $0x14] sm:$0xf]
    %v391 = vld [vmem:[#allocation7 + $0x18] sm:$0xf]
    %v392 = vld [vmem:[#allocation7 + $0x1c] sm:$0xf]
    %v393 = vld [vmem:[#allocation7 + $0x20] sm:$0xf]
    %v394 = vld [vmem:[#allocation7 + $0x24] sm:$0xf]
    %v395 = vld [vmem:[#allocation7 + $0x28] sm:$0xf]
    %v396 = vld [vmem:[#allocation7 + $0x2c] sm:$0xf]
    %v397 = vld [vmem:[#allocation7 + $0x30] sm:$0xf]
    %v398 = vld [vmem:[#allocation7 + $0x34] sm:$0xf]
    %v399 = vld [vmem:[#allocation7 + $0x38] sm:$0xf]
    %v400 = vld [vmem:[#allocation7 + $0x3c] sm:$0xf]
    %v401 = vld [vmem:[#allocation7 + $0x40] sm:$0xf]
    %v402 = vld [vmem:[#allocation7 + $0x44] sm:$0xf]
    %v403 = vld [vmem:[#allocation7 + $0x48] sm:$0xf]
    %v404 = vld [vmem:[#allocation7 + $0x4c] sm:$0xf]
    %v405 = vld [vmem:[#allocation7 + $0x50] sm:$0xf]
    %v406 = vld [vmem:[#allocation7 + $0x54] sm:$0xf]
    %v407 = vld [vmem:[#allocation7 + $0x58] sm:$0xf]
    %v408 = vld [vmem:[#allocation7 + $0x5c] sm:$0xf]
    %v409 = vld [vmem:[#allocation7 + $0x60] sm:$0xf]
    %v410 = vld [vmem:[#allocation7 + $0x64] sm:$0xf]
    %v411 = vld [vmem:[#allocation7 + $0x68] sm:$0xf]
    %v412 = vld [vmem:[#allocation7 + $0x6c] sm:$0xf]
    %v413 = vld [vmem:[#allocation7 + $0x70] sm:$0xf]
    %v414 = vld [vmem:[#allocation7 + $0x74] sm:$0xf]
    %v415 = vld [vmem:[#allocation7 + $0x78] sm:$0xf]
    %v416 = vld [vmem:[#allocation7 + $0x7c] sm:$0xf]
    %v417 = vld [vmem:[%s6] sm:$0x7]
    %v418 = vld [vmem:[#allocation2] sm:$0xff]
    %v419 = vld [vmem:[#allocation2 + $0x8] sm:$0xff]
    %v420 = vpack.c.bf16 %v418, %v418
    %v421 = vpack.c.bf16 %v419, %v419
    %v422 = vlaneseq
    %v423 = vshrl.u32 %v422, 7
    %v424 = vsub.s32 0, %v423
    %v425 = vrot.slane %v417, %v424
    %v458 = vunpack.c.l.b16 %v385
    %v459 = vunpack.c.l.b16 %v386
    %v460 = vunpack.c.l.b16 %v387
    %v461 = vunpack.c.l.b16 %v388
    %v462 = vunpack.c.l.b16 %v389
    %v463 = vunpack.c.l.b16 %v390
    %v464 = vunpack.c.l.b16 %v391
    %v465 = vunpack.c.l.b16 %v392
    %v466 = vunpack.c.l.b16 %v393
    %v467 = vunpack.c.l.b16 %v394
    %v468 = vunpack.c.l.b16 %v395
    %v469 = vunpack.c.l.b16 %v396
    %v470 = vunpack.c.l.b16 %v397
    %v471 = vunpack.c.l.b16 %v398
    %v472 = vunpack.c.l.b16 %v399
    %v473 = vunpack.c.l.b16 %v400
    %v474 = vunpack.c.l.b16 %v401
    %v475 = vunpack.c.l.b16 %v402
    %v476 = vunpack.c.l.b16 %v403
    %v477 = vunpack.c.l.b16 %v404
    %v478 = vunpack.c.l.b16 %v405
    %v479 = vunpack.c.l.b16 %v406
    %v480 = vunpack.c.l.b16 %v407
    %v481 = vunpack.c.l.b16 %v408
    %v482 = vunpack.c.l.b16 %v409
    %v483 = vunpack.c.l.b16 %v410
    %v484 = vunpack.c.l.b16 %v411
    %v485 = vunpack.c.l.b16 %v412
    %v486 = vunpack.c.l.b16 %v413
    %v487 = vunpack.c.l.b16 %v414
    %v488 = vunpack.c.l.b16 %v415
    %v489 = vunpack.c.l.b16 %v416
    %v490 = vpack.c.b16 %v459, %v458
    %v491 = vpack.c.b16 %v461, %v460
    %v492 = vpack.c.b16 %v463, %v462
    %v493 = vpack.c.b16 %v465, %v464
    %v494 = vpack.c.b16 %v467, %v466
    %v495 = vpack.c.b16 %v469, %v468
    %v496 = vpack.c.b16 %v471, %v470
    %v497 = vpack.c.b16 %v473, %v472
    %v498 = vpack.c.b16 %v475, %v474
    %v499 = vpack.c.b16 %v477, %v476
    %v500 = vpack.c.b16 %v479, %v478
    %v501 = vpack.c.b16 %v481, %v480
    %v502 = vpack.c.b16 %v483, %v482
    %v503 = vpack.c.b16 %v485, %v484
    %v504 = vpack.c.b16 %v487, %v486
    %v505 = vpack.c.b16 %v489, %v488
    %522 = vmatprep.subr.bf16.mxu0 0
    %523 = vmatpush1.bf16.msra.mxu0 %v497
    %524 = vmatprep.subr.bf16.mxu0 0
    %525 = vmatpush1.bf16.msra.mxu0 %v496
    %526 = vmatprep.subr.bf16.mxu0 0
    %527 = vmatpush1.bf16.msra.mxu0 %v495
    %528 = vmatprep.subr.bf16.mxu0 0
    %529 = vmatpush1.bf16.msra.mxu0 %v494
    %530 = vmatprep.subr.bf16.mxu0 0
    %531 = vmatpush1.bf16.msra.mxu0 %v493
    %532 = vmatprep.subr.bf16.mxu0 0
    %533 = vmatpush1.bf16.msra.mxu0 %v492
    %534 = vmatprep.subr.bf16.mxu0 0
    %535 = vmatpush1.bf16.msra.mxu0 %v491
    %536 = vmatprep.subr.bf16.mxu0 0
    %537 = vmatpush1.bf16.msra.mxu0 %v490
    %538 = vmatprep.subr.bf16.mxu0 0
    %539 = vmatpush2.bf16.msra.mxu0 %v505
    %540 = vmatprep.subr.bf16.mxu0 0
    %541 = vmatpush2.bf16.msra.mxu0 %v504
    %542 = vmatprep.subr.bf16.mxu0 0
    %543 = vmatpush2.bf16.msra.mxu0 %v503
    %544 = vmatprep.subr.bf16.mxu0 0
    %545 = vmatpush2.bf16.msra.mxu0 %v502
    %546 = vmatprep.subr.bf16.mxu0 0
    %547 = vmatpush2.bf16.msra.mxu0 %v501
    %548 = vmatprep.subr.bf16.mxu0 0
    %549 = vmatpush2.bf16.msra.mxu0 %v500
    %550 = vmatprep.subr.bf16.mxu0 0
    %551 = vmatpush2.bf16.msra.mxu0 %v499
    %552 = vmatprep.subr.bf16.mxu0 0
    %553 = vmatpush2.bf16.msra.mxu0 %v498
    %554 = vmatprep.mubr.bf16.mxu0 %v421
    %555 = vmatmul.mubr.bf16.gmra.mxu0 %v420
    %v556 = vpop.f32.mrf.mxu0
    %v557 = vadd.f32 %v425, %v556
    %v558 = vpop.f32.mrf.mxu0
    %v559 = vpop.f32.mrf.mxu0
    %v560 = vpop.f32.mrf.mxu0
    %561 = vdwg.mxu0
    %v562 = vtanh.pop %v557
    %v563 = vmul.f32 %v562, %v92
    %v564 = vrot.slane %v563, 4
    %v565 = vadd.f32 %v563, %v564
    %v566 = vrot.slane %v565, 2
    %v567 = vadd.f32 %v565, %v566
    %v568 = vrot.slane %v567, 1
    %v569 = vadd.f32 %v567, %v568
    %v570 = vmul.f32 %v563, %v562
    %v571 = vrot.slane %v570, 4
    %v572 = vadd.f32 %v570, %v571
    %v573 = vrot.slane %v572, 2
    %v574 = vadd.f32 %v572, %v573
    %v575 = vrot.slane %v574, 1
    %v576 = vadd.f32 %v574, %v575
    %v577 = vmul.f32 %v569, 0.16666667
    %v578 = vmul.f32 %v576, 0.16666667
    %v579 = vmul.f32 %v577, %v577
    %v580 = vsub.f32 %v578, %v579
    %v581 = vmax.f32 %v580, 0.0
    %v582 = vadd.f32 %v581, 1e-05
    %v583 = vrsqrt.pop %v582
    %v584 = vmul.f32 %v417, %v583
    %v585 = vsub.f32 %v562, %v577
    %v586 = vlaneseq
    %v587 = vshrl.u32 %v586, 7
    %v588 = vsub.s32 1, %v587
    %v589 = vrot.slane %v584, %v588
    %v590 = vmul.f32 %v585, %v589
    %v591 = vlaneseq
    %v592 = vshrl.u32 %v591, 7
    %v593 = vsub.s32 2, %v592
    %v594 = vrot.slane %v417, %v593
    %v595 = vadd.f32 %v590, %v594
    %596 = vst [vmem:[#allocation2 + $0x10] sm:$0xff] %v595
    %v597 = vld [vmem:[#allocation2 + $0x10] sm:$0xff]
    %v598 = vpack.c.bf16 %v597, %v597
    %v599 = vld [vmem:[%s8] sm:$0x7]
    %v600 = vld [vmem:[#allocation8] sm:$0xf]
    %v601 = vld [vmem:[#allocation8 + $0x4] sm:$0xf]
    %v602 = vld [vmem:[#allocation8 + $0x8] sm:$0xf]
    %v603 = vld [vmem:[#allocation8 + $0xc] sm:$0xf]
    %v604 = vld [vmem:[#allocation8 + $0x10] sm:$0xf]
    %v605 = vld [vmem:[#allocation8 + $0x14] sm:$0xf]
    %v606 = vld [vmem:[#allocation8 + $0x18] sm:$0xf]
    %v607 = vld [vmem:[#allocation8 + $0x1c] sm:$0xf]
    %v608 = vld [vmem:[#allocation8 + $0x20] sm:$0xf]
    %v609 = vld [vmem:[#allocation8 + $0x24] sm:$0xf]
    %v610 = vld [vmem:[#allocation8 + $0x28] sm:$0xf]
    %v611 = vld [vmem:[#allocation8 + $0x2c] sm:$0xf]
    %v612 = vld [vmem:[#allocation8 + $0x30] sm:$0xf]
    %v613 = vld [vmem:[#allocation8 + $0x34] sm:$0xf]
    %v614 = vld [vmem:[#allocation8 + $0x38] sm:$0xf]
    %v615 = vld [vmem:[#allocation8 + $0x3c] sm:$0xf]
    %v616 = vlaneseq
    %v617 = vshrl.u32 %v616, 7
    %v618 = vsub.s32 0, %v617
    %v619 = vrot.slane %v599, %v618
    %v636 = vunpack.c.l.b16 %v600
    %v637 = vunpack.c.l.b16 %v601
    %v638 = vunpack.c.l.b16 %v602
    %v639 = vunpack.c.l.b16 %v603
    %v640 = vunpack.c.l.b16 %v604
    %v641 = vunpack.c.l.b16 %v605
    %v642 = vunpack.c.l.b16 %v606
    %v643 = vunpack.c.l.b16 %v607
    %v644 = vunpack.c.l.b16 %v608
    %v645 = vunpack.c.l.b16 %v609
    %v646 = vunpack.c.l.b16 %v610
    %v647 = vunpack.c.l.b16 %v611
    %v648 = vunpack.c.l.b16 %v612
    %v649 = vunpack.c.l.b16 %v613
    %v650 = vunpack.c.l.b16 %v614
    %v651 = vunpack.c.l.b16 %v615
    %v652 = vpack.c.b16 %v637, %v636
    %v653 = vpack.c.b16 %v639, %v638
    %v654 = vpack.c.b16 %v641, %v640
    %v655 = vpack.c.b16 %v643, %v642
    %v656 = vpack.c.b16 %v645, %v644
    %v657 = vpack.c.b16 %v647, %v646
    %v658 = vpack.c.b16 %v649, %v648
    %v659 = vpack.c.b16 %v651, %v650
    %668 = vmatprep.subr.bf16.mxu0 0
    %669 = vmatpush1.bf16.msra.mxu0 %v659
    %670 = vmatprep.subr.bf16.mxu0 0
    %671 = vmatpush1.bf16.msra.mxu0 %v658
    %672 = vmatprep.subr.bf16.mxu0 0
    %673 = vmatpush1.bf16.msra.mxu0 %v657
    %674 = vmatprep.subr.bf16.mxu0 0
    %675 = vmatpush1.bf16.msra.mxu0 %v656
    %676 = vmatprep.subr.bf16.mxu0 0
    %677 = vmatpush1.bf16.msra.mxu0 %v655
    %678 = vmatprep.subr.bf16.mxu0 0
    %679 = vmatpush1.bf16.msra.mxu0 %v654
    %680 = vmatprep.subr.bf16.mxu0 0
    %681 = vmatpush1.bf16.msra.mxu0 %v653
    %682 = vmatprep.subr.bf16.mxu0 0
    %683 = vmatpush1.bf16.msra.mxu0 %v652
    %684 = vmatprep.subr.bf16.mxu0 0
    %685 = vmatpush2.bf16.msra.mxu0 0
    %686 = vmatprep.subr.bf16.mxu0 0
    %687 = vmatpush2.bf16.msra.mxu0 0
    %688 = vmatprep.subr.bf16.mxu0 0
    %689 = vmatpush2.bf16.msra.mxu0 0
    %690 = vmatprep.subr.bf16.mxu0 0
    %691 = vmatpush2.bf16.msra.mxu0 0
    %692 = vmatprep.subr.bf16.mxu0 0
    %693 = vmatpush2.bf16.msra.mxu0 0
    %694 = vmatprep.subr.bf16.mxu0 0
    %695 = vmatpush2.bf16.msra.mxu0 0
    %696 = vmatprep.subr.bf16.mxu0 0
    %697 = vmatpush2.bf16.msra.mxu0 0
    %698 = vmatprep.subr.bf16.mxu0 0
    %699 = vmatpush2.bf16.msra.mxu0 0
    %700 = vmatprep.mubr.bf16.mxu0 0
    %701 = vmatmul.mubr.bf16.gmra.mxu0 %v598
    %v702 = vpop.f32.mrf.mxu0
    %v703 = vadd.f32 %v619, %v702
    %v704 = vpop.f32.mrf.mxu0
    %v705 = vpop.f32.mrf.mxu0
    %v706 = vpop.f32.mrf.mxu0
    %707 = vdwg.mxu0
    %v708 = vtanh.pop %v703
    %v709 = vmul.f32 %v708, %v92
    %v710 = vrot.slane %v709, 4
    %v711 = vadd.f32 %v709, %v710
    %v712 = vrot.slane %v711, 2
    %v713 = vadd.f32 %v711, %v712
    %v714 = vrot.slane %v713, 1
    %v715 = vadd.f32 %v713, %v714
    %v716 = vmul.f32 %v709, %v708
    %v717 = vrot.slane %v716, 4
    %v718 = vadd.f32 %v716, %v717
    %v719 = vrot.slane %v718, 2
    %v720 = vadd.f32 %v718, %v719
    %v721 = vrot.slane %v720, 1
    %v722 = vadd.f32 %v720, %v721
    %v723 = vmul.f32 %v715, 0.16666667
    %v724 = vmul.f32 %v722, 0.16666667
    %v725 = vmul.f32 %v723, %v723
    %v726 = vsub.f32 %v724, %v725
    %v727 = vmax.f32 %v726, 0.0
    %v728 = vsub.f32 %v708, %v723
    %v729 = vadd.f32 %v727, 1e-05
    %v730 = vrsqrt.pop %v729
    %v731 = vmul.f32 %v599, %v730
    %v732 = vlaneseq
    %v733 = vshrl.u32 %v732, 7
    %v734 = vsub.s32 1, %v733
    %v735 = vrot.slane %v731, %v734
    %v736 = vmul.f32 %v728, %v735
    %v737 = vlaneseq
    %v738 = vshrl.u32 %v737, 7
    %v739 = vsub.s32 2, %v738
    %v740 = vrot.slane %v599, %v739
    %v741 = vadd.f32 %v736, %v740
    %742 = vst [vmem:[%s9] sm:$0xff] %v741
    // Predicated region
    $region54: #{forward.1} parent=1 // pred_check
      _
    $region55: #{forward.1} parent=1 // pred_check_branch
      %744 = sbr.rel (0) target = $region57
    $region56: #{forward.1} parent=1 // pred_region
      _
    $region57: #{forward.1} parent=1 // pred_fallthru
      _
    // Predicated region
    $region58: #{forward.1} parent=1 // pred_check
      _
    $region59: #{forward.1} parent=1 // pred_check_branch
      %746 = sbr.rel (0) target = $region61
    $region60: #{forward.1} parent=1 // pred_region
      _
    $region61: #{forward.1} parent=1 // pred_fallthru
      _
    %747 = vsyncpa [#allocation4], 1
    %748 = vsyncpa [#allocation6], 1
    %749 = vsyncpa [#allocation9], 1

</llo_original>
